<compile_context>
chip_gen: v5e
topology: v5e:2x2
jax: 0.10.0
libtpu: 0.0.40
codegen_flags: <defaults>
</compile_context>

<pallas_src>
from functools import partial

import jax
import jax.numpy as jnp
from jax.experimental import pallas as pl
from jax.experimental.pallas import tpu as pltpu

_LANE = 128
_SUBLANE = 8
_TB_MAX = 1024            # max batch rows per grid step (sweepable 512-2048)
_MIN_ROWS_PER_SPLIT = 64  # force >=2 grid steps once each tile has >= this many rows


def _cdiv(a: int, b: int) -> int:
    return (a + b - 1) // b


def _round_up(x: int, m: int) -> int:
    return _cdiv(x, m) * m


# ---------------------------------------------------------------------------
# One-time parameter layout (call at parameter-load time, not per forward).
# ---------------------------------------------------------------------------
def prepare_params(w1, b1, w2, b2, w3, b3, support, out_dim, atom_size):
    """Lay out / pad parameters for the kernel.

    Weights are stored transposed vs. PyTorch: (in_features, out_features),
    so the kernel computes x @ W + b == x @ W_pt.T + b (identical numerics).
    """
    in_dim, hid = w1.shape
    pa = _round_up(atom_size, _LANE)   # padded atoms per action (51 -> 128)

    # Head weight: zero-pad the atom axis of every action block so each
    # action's logits occupy whole vregs (unmasked lane reductions).
    w3_p = jnp.zeros((hid, out_dim, pa), jnp.float32)
    w3_p = w3_p.at[:, :, :atom_size].set(w3.reshape(hid, out_dim, atom_size))
    w3_p = w3_p.reshape(hid, out_dim * pa)

    # Head bias: padded atoms get -1e30 so exp(logit - max) == 0 exactly.
    b3_p = jnp.full((out_dim, pa), -1e30, jnp.float32)
    b3_p = b3_p.at[:, :atom_size].set(b3.reshape(out_dim, atom_size))
    b3_p = b3_p.reshape(1, out_dim * pa)

    # Shared zero-padded support row (same for every action).  Padded atoms
    # carry zero support, so their clamp-to-0.001 contributes nothing.
    sup_p = jnp.zeros((1, pa), jnp.float32)
    sup_p = sup_p.at[0, :atom_size].set(support.astype(jnp.float32))

    return (w1.astype(jnp.float32), b1.reshape(1, hid).astype(jnp.float32),
            w2.astype(jnp.float32), b2.reshape(1, hid).astype(jnp.float32),
            w3_p, b3_p, sup_p)


# ---------------------------------------------------------------------------
# Kernel
# ---------------------------------------------------------------------------
def _make_kernel(out_dim: int, pa: int):
    def kernel(x_ref, w1_ref, b1_ref, w2_ref, b2_ref, w3_ref, b3_ref, sup_ref,
               q_ref):
        # MLP trunk: Linear -> ReLU -> Linear -> ReLU  (MXU matmuls + VPU relu)
        h1 = jnp.dot(x_ref[...], w1_ref[...],
                     preferred_element_type=jnp.float32) + b1_ref[...]
        h1 = jnp.maximum(h1, 0.0)
        h2 = jnp.dot(h1, w2_ref[...],
                     preferred_element_type=jnp.float32) + b2_ref[...]
        h2 = jnp.maximum(h2, 0.0)

        # Fused head: ONE matmul produces every action's (padded) atom logits.
        logits = jnp.dot(h2, w3_ref[...],
                         preferred_element_type=jnp.float32) + b3_ref[...]

        sup = sup_ref[...]                              # (1, pa), hoisted load

        # Per-action softmax + expectation.  out_dim is small and static ->
        # Python unroll; every slice is whole vregs (128-lane aligned), so
        # max/sum are unmasked per-vreg lane reductions (XLU) and exp goes to
        # the EUP slot.  Each action writes one output column directly
        # (masked single-lane store into the (tb, out_dim) output block).
        for a in range(out_dim):
            lg = logits[:, a * pa:(a + 1) * pa]
            m = jnp.max(lg, axis=-1, keepdims=True)
            e = jnp.exp(lg - m)                         # padded atoms -> exp==0
            denom = jnp.sum(e, axis=-1, keepdims=True)
            inv = pl.reciprocal(denom, approx=True)     # EUP slot
            inv = inv * (2.0 - denom * inv)             # one Newton step: ~exact
            dist = jnp.maximum(e * inv, 0.001)          # torch .clamp(min=0.001)
            # Expectation: VPU multiply by the shared support row + lane reduce.
            q_ref[:, a:a + 1] = jnp.sum(dist * sup, axis=-1, keepdims=True)

    return kernel


# ---------------------------------------------------------------------------
# Wrapper
# ---------------------------------------------------------------------------
@partial(jax.jit, static_argnums=(2, 3))
def categorical_dqn_forward(x, params, out_dim: int, atom_size: int):
    """x: (B, in_dim) f32, params from prepare_params() -> q: (B, out_dim)."""
    w1, b1, w2, b2, w3_p, b3_p, sup_p = params
    B, in_dim = x.shape
    hid = w1.shape[1]
    pa = _round_up(atom_size, _LANE)

    # Batch tiling: big tiles (up to _TB_MAX rows) amortize per-step overhead;
    # tb is sized so padding is at most a few sublanes; force >=2 grid steps
    # for large batches so both v7x TensorCores get work ("parallel" axis).
    n_steps = _cdiv(B, _TB_MAX)
    if B >= 2 * _MIN_ROWS_PER_SPLIT:
        n_steps = max(n_steps, 2)
    tb = _round_up(_cdiv(B, n_steps), _SUBLANE)
    b_pad = n_steps * tb

    x_p = x.astype(jnp.float32)
    if b_pad != B:
        x_p = jnp.pad(x_p, ((0, b_pad - B), (0, 0)))

    const = lambda i: (0, 0)   # weights stay VMEM-resident across grid steps
    q_pad = pl.pallas_call(
        _make_kernel(out_dim, pa),
        out_shape=jax.ShapeDtypeStruct((b_pad, out_dim), jnp.float32),
        grid_spec=pltpu.PrefetchScalarGridSpec(
            num_scalar_prefetch=0,
            grid=(n_steps,),
            in_specs=[
                pl.BlockSpec((tb, in_dim), lambda i: (i, 0)),      # x
                pl.BlockSpec((in_dim, hid), const),                # w1
                pl.BlockSpec((1, hid), const),                     # b1
                pl.BlockSpec((hid, hid), const),                   # w2
                pl.BlockSpec((1, hid), const),                     # b2
                pl.BlockSpec((hid, out_dim * pa), const),          # w3 (padded)
                pl.BlockSpec((1, out_dim * pa), const),            # b3 (padded)
                pl.BlockSpec((1, pa), const),                      # support row
            ],
            out_specs=pl.BlockSpec((tb, out_dim), lambda i: (i, 0)),
        ),
        compiler_params=pltpu.CompilerParams(
            dimension_semantics=("parallel",)),
    )(x_p, w1, b1, w2, b2, w3_p, b3_p, sup_p)

    return q_pad[:B]


# ---------------------------------------------------------------------------
# Pure-JAX reference (mirrors the PyTorch module exactly)
# ---------------------------------------------------------------------------
def reference_forward(x, w1, b1, w2, b2, w3, b3, support, out_dim, atom_size):
    h1 = jnp.maximum(x @ w1 + b1, 0.0)
    h2 = jnp.maximum(h1 @ w2 + b2, 0.0)
    q_atoms = (h2 @ w3 + b3).reshape(-1, out_dim, atom_size)
    dist = jax.nn.softmax(q_atoms, axis=-1)
    dist = jnp.maximum(dist, 0.001)          # torch .clamp(min=0.001)
    return jnp.sum(dist * support, axis=2)


if __name__ == "__main__":
    # Small shapes consistent with the module's MLP forward.
    B, in_dim, hid_dim, out_dim, atom_size = 2, 16, 32, 4, 51

    key = jax.random.PRNGKey(0)
    ks = jax.random.split(key, 7)
    scale1 = 1.0 / jnp.sqrt(in_dim)
    scale2 = 1.0 / jnp.sqrt(hid_dim)

    w1 = jax.random.uniform(ks[0], (in_dim, hid_dim), jnp.float32, -scale1, scale1)
    b1 = jax.random.uniform(ks[1], (hid_dim,), jnp.float32, -scale1, scale1)
    w2 = jax.random.uniform(ks[2], (hid_dim, hid_dim), jnp.float32, -scale2, scale2)
    b2 = jax.random.uniform(ks[3], (hid_dim,), jnp.float32, -scale2, scale2)
    w3 = jax.random.uniform(ks[4], (hid_dim, out_dim * atom_size), jnp.float32, -scale2, scale2)
    b3 = jax.random.uniform(ks[5], (out_dim * atom_size,), jnp.float32, -scale2, scale2)
    x = jax.random.normal(ks[6], (B, in_dim), jnp.float32)

    # Categorical-DQN support (v_min=-10, v_max=10, atom_size atoms).
    support = jnp.linspace(-10.0, 10.0, atom_size, dtype=jnp.float32)

    # One-time layout (off the per-step path).
    params = prepare_params(w1, b1, w2, b2, w3, b3, support, out_dim, atom_size)
    params = jax.tree_util.tree_map(jax.block_until_ready, params)

    q = categorical_dqn_forward(x, params, out_dim, atom_size)
    jax.block_until_ready(q)

    q_ref = reference_forward(x, w1, b1, w2, b2, w3, b3, support,
                              out_dim, atom_size)
    assert q.shape == (B, out_dim)
    assert jnp.allclose(q, q_ref, atol=1e-4, rtol=1e-4), "mismatch vs reference"

    print("KERNEL_OK")
</pallas_src>

<mosaic_0001>
module attributes {stable_mosaic.version = 11 : i64} {
  func.func @kernel(%arg0: i32, %arg1: memref<8x16xf32, #tpu.memory_space<vmem>>, %arg2: memref<16x32xf32, #tpu.memory_space<vmem>>, %arg3: memref<1x32xf32, #tpu.memory_space<vmem>>, %arg4: memref<32x32xf32, #tpu.memory_space<vmem>>, %arg5: memref<1x32xf32, #tpu.memory_space<vmem>>, %arg6: memref<32x512xf32, #tpu.memory_space<vmem>>, %arg7: memref<1x512xf32, #tpu.memory_space<vmem>>, %arg8: memref<1x128xf32, #tpu.memory_space<vmem>>, %arg9: memref<8x4xf32, #tpu.memory_space<vmem>>) attributes {dimension_semantics = [#tpu.dimension_semantics<parallel>], iteration_bounds = array<i64: 1>, scalar_prefetch = 0 : i64, scratch_operands = 0 : i64, tpu.core_type = #tpu.core_type<tc>, window_params = [{transform_indices = @transform_0, window_bounds = array<i64: 8, 16>}, {pipeline_mode = #tpu.pipeline_mode<synchronous>, transform_indices = @transform_1, window_bounds = array<i64: 16, 32>}, {pipeline_mode = #tpu.pipeline_mode<synchronous>, transform_indices = @transform_2, window_bounds = array<i64: 1, 32>}, {pipeline_mode = #tpu.pipeline_mode<synchronous>, transform_indices = @transform_3, window_bounds = array<i64: 32, 32>}, {pipeline_mode = #tpu.pipeline_mode<synchronous>, transform_indices = @transform_4, window_bounds = array<i64: 1, 32>}, {pipeline_mode = #tpu.pipeline_mode<synchronous>, transform_indices = @transform_5, window_bounds = array<i64: 32, 512>}, {pipeline_mode = #tpu.pipeline_mode<synchronous>, transform_indices = @transform_6, window_bounds = array<i64: 1, 512>}, {pipeline_mode = #tpu.pipeline_mode<synchronous>, transform_indices = @transform_7, window_bounds = array<i64: 1, 128>}, {transform_indices = @transform_8, window_bounds = array<i64: 8, 4>}]} {
    %c0 = arith.constant 0 : index
    %c0_0 = arith.constant 0 : index
    %0 = vector.load %arg1[%c0, %c0_0] : memref<8x16xf32, #tpu.memory_space<vmem>>, vector<8x16xf32>
    %c0_1 = arith.constant 0 : index
    %c0_2 = arith.constant 0 : index
    %1 = vector.load %arg2[%c0_1, %c0_2] : memref<16x32xf32, #tpu.memory_space<vmem>>, vector<16x32xf32>
    %cst = arith.constant dense<0.000000e+00> : vector<8x32xf32>
    %2 = tpu.matmul %0, %1, %cst {dimension_numbers = #tpu.dot_dimension_numbers<[1], [0], [0], [1], [0, 0, 1, 1], [], []>} : vector<8x16xf32>, vector<16x32xf32>, vector<8x32xf32> -> vector<8x32xf32>
    %c0_3 = arith.constant 0 : index
    %c0_4 = arith.constant 0 : index
    %3 = vector.load %arg3[%c0_3, %c0_4] : memref<1x32xf32, #tpu.memory_space<vmem>>, vector<1x32xf32>
    %4 = vector.broadcast %3 : vector<1x32xf32> to vector<8x32xf32>
    %5 = arith.addf %2, %4 : vector<8x32xf32>
    %cst_5 = arith.constant 0.000000e+00 : f32
    %6 = vector.broadcast %cst_5 : f32 to vector<8x32xf32>
    %7 = arith.maximumf %5, %6 : vector<8x32xf32>
    %c0_6 = arith.constant 0 : index
    %c0_7 = arith.constant 0 : index
    %8 = vector.load %arg4[%c0_6, %c0_7] : memref<32x32xf32, #tpu.memory_space<vmem>>, vector<32x32xf32>
    %cst_8 = arith.constant dense<0.000000e+00> : vector<8x32xf32>
    %9 = tpu.matmul %7, %8, %cst_8 {dimension_numbers = #tpu.dot_dimension_numbers<[1], [0], [0], [1], [0, 0, 1, 1], [], []>} : vector<8x32xf32>, vector<32x32xf32>, vector<8x32xf32> -> vector<8x32xf32>
    %c0_9 = arith.constant 0 : index
    %c0_10 = arith.constant 0 : index
    %10 = vector.load %arg5[%c0_9, %c0_10] : memref<1x32xf32, #tpu.memory_space<vmem>>, vector<1x32xf32>
    %11 = vector.broadcast %10 : vector<1x32xf32> to vector<8x32xf32>
    %12 = arith.addf %9, %11 : vector<8x32xf32>
    %cst_11 = arith.constant 0.000000e+00 : f32
    %13 = vector.broadcast %cst_11 : f32 to vector<8x32xf32>
    %14 = arith.maximumf %12, %13 : vector<8x32xf32>
    %c0_12 = arith.constant 0 : index
    %c0_13 = arith.constant 0 : index
    %15 = vector.load %arg6[%c0_12, %c0_13] : memref<32x512xf32, #tpu.memory_space<vmem>>, vector<32x512xf32>
    %cst_14 = arith.constant dense<0.000000e+00> : vector<8x512xf32>
    %16 = tpu.matmul %14, %15, %cst_14 {dimension_numbers = #tpu.dot_dimension_numbers<[1], [0], [0], [1], [0, 0, 1, 1], [], []>} : vector<8x32xf32>, vector<32x512xf32>, vector<8x512xf32> -> vector<8x512xf32>
    %c0_15 = arith.constant 0 : index
    %c0_16 = arith.constant 0 : index
    %17 = vector.load %arg7[%c0_15, %c0_16] : memref<1x512xf32, #tpu.memory_space<vmem>>, vector<1x512xf32>
    %18 = vector.broadcast %17 : vector<1x512xf32> to vector<8x512xf32>
    %19 = arith.addf %16, %18 : vector<8x512xf32>
    %c0_17 = arith.constant 0 : index
    %c0_18 = arith.constant 0 : index
    %20 = vector.load %arg8[%c0_17, %c0_18] : memref<1x128xf32, #tpu.memory_space<vmem>>, vector<1x128xf32>
    %21 = vector.extract_strided_slice %19 {offsets = [0, 0], sizes = [8, 128], strides = [1, 1]} : vector<8x512xf32> to vector<8x128xf32>
    %cst_19 = arith.constant dense<0xFF800000> : vector<8xf32>
    %22 = vector.multi_reduction <maximumf>, %21, %cst_19 [1] : vector<8x128xf32> to vector<8xf32>
    %23 = vector.shape_cast %22 : vector<8xf32> to vector<8x1xf32>
    %24 = vector.broadcast %23 : vector<8x1xf32> to vector<8x128xf32>
    %25 = arith.subf %21, %24 : vector<8x128xf32>
    %26 = math.exp %25 : vector<8x128xf32>
    %cst_20 = arith.constant dense<0.000000e+00> : vector<8xf32>
    %27 = vector.multi_reduction <add>, %26, %cst_20 [1] : vector<8x128xf32> to vector<8xf32>
    %28 = vector.shape_cast %27 : vector<8xf32> to vector<8x1xf32>
    %29 = tpu.reciprocal %28 {approx = true} : vector<8x1xf32> -> vector<8x1xf32>
    %30 = arith.mulf %28, %29 : vector<8x1xf32>
    %cst_21 = arith.constant 2.000000e+00 : f32
    %31 = vector.broadcast %cst_21 : f32 to vector<8x1xf32>
    %32 = arith.subf %31, %30 : vector<8x1xf32>
    %33 = arith.mulf %29, %32 : vector<8x1xf32>
    %34 = vector.broadcast %33 : vector<8x1xf32> to vector<8x128xf32>
    %35 = arith.mulf %26, %34 : vector<8x128xf32>
    %cst_22 = arith.constant 1.000000e-03 : f32
    %36 = vector.broadcast %cst_22 : f32 to vector<8x128xf32>
    %37 = arith.maximumf %35, %36 : vector<8x128xf32>
    %38 = vector.broadcast %20 : vector<1x128xf32> to vector<8x128xf32>
    %39 = arith.mulf %37, %38 : vector<8x128xf32>
    %cst_23 = arith.constant dense<0.000000e+00> : vector<8xf32>
    %40 = vector.multi_reduction <add>, %39, %cst_23 [1] : vector<8x128xf32> to vector<8xf32>
    %41 = vector.shape_cast %40 : vector<8xf32> to vector<8x1xf32>
    %c0_24 = arith.constant 0 : index
    %c0_25 = arith.constant 0 : index
    %42 = vector.load %arg9[%c0_24, %c0_25] : memref<8x4xf32, #tpu.memory_space<vmem>>, vector<8x1xf32>
    tpu.vector_store %arg9[%c0_24, %c0_25], %41 {strides = array<i32>} : memref<8x4xf32, #tpu.memory_space<vmem>>, vector<8x1xf32>,
    %43 = vector.extract_strided_slice %19 {offsets = [0, 128], sizes = [8, 128], strides = [1, 1]} : vector<8x512xf32> to vector<8x128xf32>
    %cst_26 = arith.constant dense<0xFF800000> : vector<8xf32>
    %44 = vector.multi_reduction <maximumf>, %43, %cst_26 [1] : vector<8x128xf32> to vector<8xf32>
    %45 = vector.shape_cast %44 : vector<8xf32> to vector<8x1xf32>
    %46 = vector.broadcast %45 : vector<8x1xf32> to vector<8x128xf32>
    %47 = arith.subf %43, %46 : vector<8x128xf32>
    %48 = math.exp %47 : vector<8x128xf32>
    %cst_27 = arith.constant dense<0.000000e+00> : vector<8xf32>
    %49 = vector.multi_reduction <add>, %48, %cst_27 [1] : vector<8x128xf32> to vector<8xf32>
    %50 = vector.shape_cast %49 : vector<8xf32> to vector<8x1xf32>
    %51 = tpu.reciprocal %50 {approx = true} : vector<8x1xf32> -> vector<8x1xf32>
    %52 = arith.mulf %50, %51 : vector<8x1xf32>
    %cst_28 = arith.constant 2.000000e+00 : f32
    %53 = vector.broadcast %cst_28 : f32 to vector<8x1xf32>
    %54 = arith.subf %53, %52 : vector<8x1xf32>
    %55 = arith.mulf %51, %54 : vector<8x1xf32>
    %56 = vector.broadcast %55 : vector<8x1xf32> to vector<8x128xf32>
    %57 = arith.mulf %48, %56 : vector<8x128xf32>
    %cst_29 = arith.constant 1.000000e-03 : f32
    %58 = vector.broadcast %cst_29 : f32 to vector<8x128xf32>
    %59 = arith.maximumf %57, %58 : vector<8x128xf32>
    %60 = vector.broadcast %20 : vector<1x128xf32> to vector<8x128xf32>
    %61 = arith.mulf %59, %60 : vector<8x128xf32>
    %cst_30 = arith.constant dense<0.000000e+00> : vector<8xf32>
    %62 = vector.multi_reduction <add>, %61, %cst_30 [1] : vector<8x128xf32> to vector<8xf32>
    %63 = vector.shape_cast %62 : vector<8xf32> to vector<8x1xf32>
    %c0_31 = arith.constant 0 : index
    %c1 = arith.constant 1 : index
    %64 = vector.load %arg9[%c0_31, %c1] : memref<8x4xf32, #tpu.memory_space<vmem>>, vector<8x1xf32>
    tpu.vector_store %arg9[%c0_31, %c1], %63 {strides = array<i32>} : memref<8x4xf32, #tpu.memory_space<vmem>>, vector<8x1xf32>,
    %65 = vector.extract_strided_slice %19 {offsets = [0, 256], sizes = [8, 128], strides = [1, 1]} : vector<8x512xf32> to vector<8x128xf32>
    %cst_32 = arith.constant dense<0xFF800000> : vector<8xf32>
    %66 = vector.multi_reduction <maximumf>, %65, %cst_32 [1] : vector<8x128xf32> to vector<8xf32>
    %67 = vector.shape_cast %66 : vector<8xf32> to vector<8x1xf32>
    %68 = vector.broadcast %67 : vector<8x1xf32> to vector<8x128xf32>
    %69 = arith.subf %65, %68 : vector<8x128xf32>
    %70 = math.exp %69 : vector<8x128xf32>
    %cst_33 = arith.constant dense<0.000000e+00> : vector<8xf32>
    %71 = vector.multi_reduction <add>, %70, %cst_33 [1] : vector<8x128xf32> to vector<8xf32>
    %72 = vector.shape_cast %71 : vector<8xf32> to vector<8x1xf32>
    %73 = tpu.reciprocal %72 {approx = true} : vector<8x1xf32> -> vector<8x1xf32>
    %74 = arith.mulf %72, %73 : vector<8x1xf32>
    %cst_34 = arith.constant 2.000000e+00 : f32
    %75 = vector.broadcast %cst_34 : f32 to vector<8x1xf32>
    %76 = arith.subf %75, %74 : vector<8x1xf32>
    %77 = arith.mulf %73, %76 : vector<8x1xf32>
    %78 = vector.broadcast %77 : vector<8x1xf32> to vector<8x128xf32>
    %79 = arith.mulf %70, %78 : vector<8x128xf32>
    %cst_35 = arith.constant 1.000000e-03 : f32
    %80 = vector.broadcast %cst_35 : f32 to vector<8x128xf32>
    %81 = arith.maximumf %79, %80 : vector<8x128xf32>
    %82 = vector.broadcast %20 : vector<1x128xf32> to vector<8x128xf32>
    %83 = arith.mulf %81, %82 : vector<8x128xf32>
    %cst_36 = arith.constant dense<0.000000e+00> : vector<8xf32>
    %84 = vector.multi_reduction <add>, %83, %cst_36 [1] : vector<8x128xf32> to vector<8xf32>
    %85 = vector.shape_cast %84 : vector<8xf32> to vector<8x1xf32>
    %c0_37 = arith.constant 0 : index
    %c2 = arith.constant 2 : index
    %86 = vector.load %arg9[%c0_37, %c2] : memref<8x4xf32, #tpu.memory_space<vmem>>, vector<8x1xf32>
    tpu.vector_store %arg9[%c0_37, %c2], %85 {strides = array<i32>} : memref<8x4xf32, #tpu.memory_space<vmem>>, vector<8x1xf32>,
    %87 = vector.extract_strided_slice %19 {offsets = [0, 384], sizes = [8, 128], strides = [1, 1]} : vector<8x512xf32> to vector<8x128xf32>
    %cst_38 = arith.constant dense<0xFF800000> : vector<8xf32>
    %88 = vector.multi_reduction <maximumf>, %87, %cst_38 [1] : vector<8x128xf32> to vector<8xf32>
    %89 = vector.shape_cast %88 : vector<8xf32> to vector<8x1xf32>
    %90 = vector.broadcast %89 : vector<8x1xf32> to vector<8x128xf32>
    %91 = arith.subf %87, %90 : vector<8x128xf32>
    %92 = math.exp %91 : vector<8x128xf32>
    %cst_39 = arith.constant dense<0.000000e+00> : vector<8xf32>
    %93 = vector.multi_reduction <add>, %92, %cst_39 [1] : vector<8x128xf32> to vector<8xf32>
    %94 = vector.shape_cast %93 : vector<8xf32> to vector<8x1xf32>
    %95 = tpu.reciprocal %94 {approx = true} : vector<8x1xf32> -> vector<8x1xf32>
    %96 = arith.mulf %94, %95 : vector<8x1xf32>
    %cst_40 = arith.constant 2.000000e+00 : f32
    %97 = vector.broadcast %cst_40 : f32 to vector<8x1xf32>
    %98 = arith.subf %97, %96 : vector<8x1xf32>
    %99 = arith.mulf %95, %98 : vector<8x1xf32>
    %100 = vector.broadcast %99 : vector<8x1xf32> to vector<8x128xf32>
    %101 = arith.mulf %92, %100 : vector<8x128xf32>
    %cst_41 = arith.constant 1.000000e-03 : f32
    %102 = vector.broadcast %cst_41 : f32 to vector<8x128xf32>
    %103 = arith.maximumf %101, %102 : vector<8x128xf32>
    %104 = vector.broadcast %20 : vector<1x128xf32> to vector<8x128xf32>
    %105 = arith.mulf %103, %104 : vector<8x128xf32>
    %cst_42 = arith.constant dense<0.000000e+00> : vector<8xf32>
    %106 = vector.multi_reduction <add>, %105, %cst_42 [1] : vector<8x128xf32> to vector<8xf32>
    %107 = vector.shape_cast %106 : vector<8xf32> to vector<8x1xf32>
    %c0_43 = arith.constant 0 : index
    %c3 = arith.constant 3 : index
    %108 = vector.load %arg9[%c0_43, %c3] : memref<8x4xf32, #tpu.memory_space<vmem>>, vector<8x1xf32>
    tpu.vector_store %arg9[%c0_43, %c3], %107 {strides = array<i32>} : memref<8x4xf32, #tpu.memory_space<vmem>>, vector<8x1xf32>,
    return
  }
  func.func @transform_0(%arg0: i32) -> (i32, i32) {
    %c0_i32 = arith.constant 0 : i32
    %c0_i32_0 = arith.constant 0 : i32
    return %arg0, %c0_i32 : i32, i32
  }
  func.func @transform_1(%arg0: i32) -> (i32, i32) {
    %c0_i32 = arith.constant 0 : i32
    %c0_i32_0 = arith.constant 0 : i32
    %c0_i32_1 = arith.constant 0 : i32
    return %c0_i32, %c0_i32_0 : i32, i32
  }
  func.func @transform_2(%arg0: i32) -> (i32, i32) {
    %c0_i32 = arith.constant 0 : i32
    %c0_i32_0 = arith.constant 0 : i32
    %c0_i32_1 = arith.constant 0 : i32
    return %c0_i32, %c0_i32_0 : i32, i32
  }
  func.func @transform_3(%arg0: i32) -> (i32, i32) {
    %c0_i32 = arith.constant 0 : i32
    %c0_i32_0 = arith.constant 0 : i32
    %c0_i32_1 = arith.constant 0 : i32
    return %c0_i32, %c0_i32_0 : i32, i32
  }
  func.func @transform_4(%arg0: i32) -> (i32, i32) {
    %c0_i32 = arith.constant 0 : i32
    %c0_i32_0 = arith.constant 0 : i32
    %c0_i32_1 = arith.constant 0 : i32
    return %c0_i32, %c0_i32_0 : i32, i32
  }
  func.func @transform_5(%arg0: i32) -> (i32, i32) {
    %c0_i32 = arith.constant 0 : i32
    %c0_i32_0 = arith.constant 0 : i32
    %c0_i32_1 = arith.constant 0 : i32
    return %c0_i32, %c0_i32_0 : i32, i32
  }
  func.func @transform_6(%arg0: i32) -> (i32, i32) {
    %c0_i32 = arith.constant 0 : i32
    %c0_i32_0 = arith.constant 0 : i32
    %c0_i32_1 = arith.constant 0 : i32
    return %c0_i32, %c0_i32_0 : i32, i32
  }
  func.func @transform_7(%arg0: i32) -> (i32, i32) {
    %c0_i32 = arith.constant 0 : i32
    %c0_i32_0 = arith.constant 0 : i32
    %c0_i32_1 = arith.constant 0 : i32
    return %c0_i32, %c0_i32_0 : i32, i32
  }
  func.func @transform_8(%arg0: i32) -> (i32, i32) {
    %c0_i32 = arith.constant 0 : i32
    %c0_i32_0 = arith.constant 0 : i32
    return %arg0, %c0_i32 : i32, i32
  }
}

</mosaic_0001>

<llo_original>
// kernel: categorical_dqn_forward.1
$region0: #{categorical_dqn_forward.1}
  #allocation0 [shape = 'u32[]', space=smem, size = 0x4, offset = 0x4, fixed_abs, tag = 'smem constant byte address 0x4 - core index']
  #allocation1 [shape = 'u32[72,128]{1,0:T(1,128)}', space=vmem, size = 0x9000, scoped, tag = 'internal scratch']
  %s0 = inlined_call_operand.vmem [shape: f32[8,16], index: 0, kind: input, shape index: {}]
  %s1 = inlined_call_operand.hbm [shape: f32[16,32], index: 1, kind: input, shape index: {}]
  %s2 = inlined_call_operand.vmem [shape: f32[1,32], index: 2, kind: input, shape index: {}]
  %s3 = inlined_call_operand.hbm [shape: f32[32,32], index: 3, kind: input, shape index: {}]
  %s4 = inlined_call_operand.vmem [shape: f32[1,32], index: 4, kind: input, shape index: {}]
  %s5 = inlined_call_operand.hbm [shape: f32[32,512], index: 5, kind: input, shape index: {}]
  %s6 = inlined_call_operand.vmem [shape: f32[1,512], index: 6, kind: input, shape index: {}]
  %s7 = inlined_call_operand.vmem [shape: f32[1,128], index: 7, kind: input, shape index: {}]
  %s8 = inlined_call_operand.vmem [shape: f32[8,4], index: 8, kind: output, shape index: {}]
  %s9 = sld [smem:[#allocation0]]
  $region54: #{categorical_dqn_forward.1} parent=0
    _
  %s11 = ssub.s32 1, %s9
  %s12 = scalar_select 0, %s11, %s9
  $region1: #{categorical_dqn_forward.1} parent=0
    #allocation2 [shape = 'u8[8192]{0}', space=vmem, size = 0x2000, scoped, tag = 'input window, operand 1, single buffered']
    #allocation3 [shape = 's32[1]{0}', space=sflag, size = 0x4, scoped, tag = 'scoped memory for categorical_dqn_forward.1']
    #allocation4 [shape = 'u8[16384]{0}', space=vmem, size = 0x4000, scoped, tag = 'input window, operand 3, single buffered']
    #allocation5 [shape = 's32[1]{0}', space=sflag, size = 0x4, scoped, tag = 'scoped memory for categorical_dqn_forward.1']
    #allocation6 [shape = 'u8[65536]{0}', space=vmem, size = 0x10000, scoped, tag = 'input window, operand 5, single buffered']
    %13 = vsyncpa [#allocation3], 0
    %14 = vsyncpa [#allocation5], 0
    // Predicated region
    $region2: #{categorical_dqn_forward.1} parent=1 // pred_check
      _
    $region3: #{categorical_dqn_forward.1} parent=1 // pred_check_branch
      %16 = sbr.rel (0) target = $region5
    $region4: #{categorical_dqn_forward.1} parent=1 // pred_region
      _
    $region5: #{categorical_dqn_forward.1} parent=1 // pred_fallthru
      _
    // Predicated region
    $region6: #{categorical_dqn_forward.1} parent=1 // pred_check
      _
    $region7: #{categorical_dqn_forward.1} parent=1 // pred_check_branch
      %18 = sbr.rel (0) target = $region9
    $region8: #{categorical_dqn_forward.1} parent=1 // pred_region
      %20 = vsyncadd [#allocation3], 0
      %s21 = sshll.u32 %s1, 4
      %s22 = int_to_ptr.hbm [resolvable:$true] %s21
      %s23 = sshll.u32 [#allocation2], 4
      %s24 = int_to_ptr.vmem [resolvable:$true] %s23
      %29 = dma.hbm_to_vmem [thread:$0]  %s22, 256, %s24, [#allocation3], 128, 128, 8
    $region9: #{categorical_dqn_forward.1} parent=1 // pred_fallthru
      _
    // Predicated region
    $region10: #{categorical_dqn_forward.1} parent=1 // pred_check
      _
    $region11: #{categorical_dqn_forward.1} parent=1 // pred_check_branch
      %31 = sbr.rel (0) target = $region13
    $region12: #{categorical_dqn_forward.1} parent=1 // pred_region
      _
    $region13: #{categorical_dqn_forward.1} parent=1 // pred_fallthru
      _
    // Predicated region
    $region14: #{categorical_dqn_forward.1} parent=1 // pred_check
      _
    $region15: #{categorical_dqn_forward.1} parent=1 // pred_check_branch
      %33 = sbr.rel (0) target = $region17
    $region16: #{categorical_dqn_forward.1} parent=1 // pred_region
      %35 = vsyncadd [#allocation5], 0
      %s36 = sshll.u32 %s3, 4
      %s37 = int_to_ptr.hbm [resolvable:$true] %s36
      %s38 = sshll.u32 [#allocation4], 4
      %s39 = int_to_ptr.vmem [resolvable:$true] %s38
      %44 = dma.hbm_to_vmem [thread:$0]  %s37, 512, %s39, [#allocation5], 128, 128, 8
    $region17: #{categorical_dqn_forward.1} parent=1 // pred_fallthru
      _
    // Predicated region
    $region18: #{categorical_dqn_forward.1} parent=1 // pred_check
      _
    $region19: #{categorical_dqn_forward.1} parent=1 // pred_check_branch
      %46 = sbr.rel (0) target = $region21
    $region20: #{categorical_dqn_forward.1} parent=1 // pred_region
      _
    $region21: #{categorical_dqn_forward.1} parent=1 // pred_fallthru
      _
    // Predicated region
    $region22: #{categorical_dqn_forward.1} parent=1 // pred_check
      _
    $region23: #{categorical_dqn_forward.1} parent=1 // pred_check_branch
      %48 = sbr.rel (0) target = $region25
    $region24: #{categorical_dqn_forward.1} parent=1 // pred_region
      %50 = vsyncadd [#allocation5], 0
      %s51 = sshll.u32 %s5, 4
      %s52 = int_to_ptr.hbm [resolvable:$true] %s51
      %s53 = sshll.u32 [#allocation6], 4
      %s54 = int_to_ptr.vmem [resolvable:$true] %s53
      %59 = dma.hbm_to_vmem [thread:$0]  %s52, 2048, %s54, [#allocation5], 512, 512, 32
    $region25: #{categorical_dqn_forward.1} parent=1 // pred_fallthru
      _
    // Predicated region
    $region26: #{categorical_dqn_forward.1} parent=1 // pred_check
      _
    $region27: #{categorical_dqn_forward.1} parent=1 // pred_check_branch
      %61 = sbr.rel (0) target = $region29
    $region28: #{categorical_dqn_forward.1} parent=1 // pred_region
      _
    $region29: #{categorical_dqn_forward.1} parent=1 // pred_fallthru
      _
    // Predicated region
    $region30: #{categorical_dqn_forward.1} parent=1 // pred_check
      _
    $region31: #{categorical_dqn_forward.1} parent=1 // pred_check_branch
      %63 = sbr.rel (0) target = $region33
    $region32: #{categorical_dqn_forward.1} parent=1 // pred_region
      _
    $region33: #{categorical_dqn_forward.1} parent=1 // pred_fallthru
      _
    // Predicated region
    $region34: #{categorical_dqn_forward.1} parent=1 // pred_check
      _
    $region35: #{categorical_dqn_forward.1} parent=1 // pred_check_branch
      %65 = sbr.rel (0) target = $region37
    $region36: #{categorical_dqn_forward.1} parent=1 // pred_region
      %67 = dma.done [#allocation3], 256
    $region37: #{categorical_dqn_forward.1} parent=1 // pred_fallthru
      _
    // Predicated region
    $region38: #{categorical_dqn_forward.1} parent=1 // pred_check
      _
    $region39: #{categorical_dqn_forward.1} parent=1 // pred_check_branch
      %69 = sbr.rel (0) target = $region41
    $region40: #{categorical_dqn_forward.1} parent=1 // pred_region
      %71 = dma.done [#allocation5], 512
    $region41: #{categorical_dqn_forward.1} parent=1 // pred_fallthru
      _
    // Predicated region
    $region42: #{categorical_dqn_forward.1} parent=1 // pred_check
      _
    $region43: #{categorical_dqn_forward.1} parent=1 // pred_check_branch
      %73 = sbr.rel (0) target = $region45
    $region44: #{categorical_dqn_forward.1} parent=1 // pred_region
      %75 = dma.done [#allocation5], 2048
    $region45: #{categorical_dqn_forward.1} parent=1 // pred_fallthru
      _
    %v76 = vld [vmem:[%s0] sm:$0xff]
    %v77 = vld [vmem:[#allocation2] sm:$0xff]
    %v78 = vld [vmem:[#allocation2 + $0x8] sm:$0xff]
    %v79 = vld [vmem:[%s2] sm:$0x1]
    %v81 = vperm.slane %v79, 0
    %vm83 = vcmask 130048
    %v85 = vsel %vm83, %v76, 0
    %87 = vmatpush.msra.mxu0 0.0
    %88 = vmatpush.msra.mxu0 0.0
    %89 = vmatpush.msra.mxu0 0.0
    %90 = vmatpush.msra.mxu0 0.0
    %91 = vmatpush.msra.mxu0 0.0
    %92 = vmatpush.msra.mxu0 0.0
    %93 = vmatpush.msra.mxu0 0.0
    %94 = vmatpush.msra.mxu0 0.0
    %95 = vmatpush.msra.mxu0 0.0
    %96 = vmatpush.msra.mxu0 0.0
    %97 = vmatpush.msra.mxu0 0.0
    %98 = vmatpush.msra.mxu0 0.0
    %99 = vmatpush.msra.mxu0 0.0
    %100 = vmatpush.msra.mxu0 0.0
    %101 = vmatpush.msra.mxu0 %v78
    %102 = vmatpush.msra.mxu0 %v77
    %103 = vmatmul.f32.gmra.mxu0 %v85
    %v104 = vpop.f32.mrf.mxu0
    %v105 = vadd.f32 %v81, %v104
    %106 = vdwg.mxu0
    %v107 = vmax.f32 %v105, 0.0
    %v108 = vld [vmem:[#allocation4] sm:$0xff]
    %v109 = vld [vmem:[#allocation4 + $0x8] sm:$0xff]
    %v110 = vld [vmem:[#allocation4 + $0x10] sm:$0xff]
    %v111 = vld [vmem:[#allocation4 + $0x18] sm:$0xff]
    %v112 = vld [vmem:[%s4] sm:$0x1]
    %v114 = vperm.slane %v112, 0
    %vm116 = vcmask 261120
    %v118 = vsel %vm116, %v107, 0
    %120 = vmatpush.msra.mxu0 0.0
    %121 = vmatpush.msra.mxu0 0.0
    %122 = vmatpush.msra.mxu0 0.0
    %123 = vmatpush.msra.mxu0 0.0
    %124 = vmatpush.msra.mxu0 0.0
    %125 = vmatpush.msra.mxu0 0.0
    %126 = vmatpush.msra.mxu0 0.0
    %127 = vmatpush.msra.mxu0 0.0
    %128 = vmatpush.msra.mxu0 0.0
    %129 = vmatpush.msra.mxu0 0.0
    %130 = vmatpush.msra.mxu0 0.0
    %131 = vmatpush.msra.mxu0 0.0
    %132 = vmatpush.msra.mxu0 %v111
    %133 = vmatpush.msra.mxu0 %v110
    %134 = vmatpush.msra.mxu0 %v109
    %135 = vmatpush.msra.mxu0 %v108
    %136 = vmatmul.f32.gmra.mxu0 %v118
    %v137 = vpop.f32.mrf.mxu0
    %v138 = vadd.f32 %v114, %v137
    %139 = vdwg.mxu0
    %v140 = vmax.f32 %v138, 0.0
    %v141 = vld [vmem:[#allocation6] sm:$0xff]
    %v142 = vld [vmem:[#allocation6 + $0x8] sm:$0xff]
    %v143 = vld [vmem:[#allocation6 + $0x10] sm:$0xff]
    %v144 = vld [vmem:[#allocation6 + $0x18] sm:$0xff]
    %v145 = vld [vmem:[#allocation6 + $0x20] sm:$0xff]
    %v146 = vld [vmem:[#allocation6 + $0x28] sm:$0xff]
    %v147 = vld [vmem:[#allocation6 + $0x30] sm:$0xff]
    %v148 = vld [vmem:[#allocation6 + $0x38] sm:$0xff]
    %v149 = vld [vmem:[#allocation6 + $0x40] sm:$0xff]
    %v150 = vld [vmem:[#allocation6 + $0x48] sm:$0xff]
    %v151 = vld [vmem:[#allocation6 + $0x50] sm:$0xff]
    %v152 = vld [vmem:[#allocation6 + $0x58] sm:$0xff]
    %v153 = vld [vmem:[#allocation6 + $0x60] sm:$0xff]
    %v154 = vld [vmem:[#allocation6 + $0x68] sm:$0xff]
    %v155 = vld [vmem:[#allocation6 + $0x70] sm:$0xff]
    %v156 = vld [vmem:[#allocation6 + $0x78] sm:$0xff]
    %v157 = vld [vmem:[%s6] sm:$0xf]
    %v159 = vperm.slane %v157, 0
    %v160 = vperm.slane %v157, 1
    %v161 = vperm.slane %v157, 2
    %v162 = vperm.slane %v157, 3
    %v168 = vsel %vm116, %v140, 0
    %170 = vmatpush.msra.mxu0 0.0
    %171 = vmatpush.msra.mxu0 0.0
    %172 = vmatpush.msra.mxu0 0.0
    %173 = vmatpush.msra.mxu0 0.0
    %174 = vmatpush.msra.mxu0 0.0
    %175 = vmatpush.msra.mxu0 0.0
    %176 = vmatpush.msra.mxu0 0.0
    %177 = vmatpush.msra.mxu0 0.0
    %178 = vmatpush.msra.mxu0 0.0
    %179 = vmatpush.msra.mxu0 0.0
    %180 = vmatpush.msra.mxu0 0.0
    %181 = vmatpush.msra.mxu0 0.0
    %182 = vmatpush.msra.mxu0 %v153
    %183 = vmatpush.msra.mxu0 %v149
    %184 = vmatpush.msra.mxu0 %v145
    %185 = vmatpush.msra.mxu0 %v141
    %186 = vmatmul.f32.gmra.mxu0 %v168
    %v187 = vpop.f32.mrf.mxu0
    %v188 = vadd.f32 %v159, %v187
    %189 = vdwg.mxu0
    %190 = vmatpush.msra.mxu0 0.0
    %191 = vmatpush.msra.mxu0 0.0
    %192 = vmatpush.msra.mxu0 0.0
    %193 = vmatpush.msra.mxu0 0.0
    %194 = vmatpush.msra.mxu0 0.0
    %195 = vmatpush.msra.mxu0 0.0
    %196 = vmatpush.msra.mxu0 0.0
    %197 = vmatpush.msra.mxu0 0.0
    %198 = vmatpush.msra.mxu0 0.0
    %199 = vmatpush.msra.mxu0 0.0
    %200 = vmatpush.msra.mxu0 0.0
    %201 = vmatpush.msra.mxu0 0.0
    %202 = vmatpush.msra.mxu0 %v154
    %203 = vmatpush.msra.mxu0 %v150
    %204 = vmatpush.msra.mxu0 %v146
    %205 = vmatpush.msra.mxu0 %v142
    %206 = vmatmul.f32.gmra.mxu0 %v168
    %v207 = vpop.f32.mrf.mxu0
    %v208 = vadd.f32 %v160, %v207
    %209 = vdwg.mxu0
    %210 = vmatpush.msra.mxu0 0.0
    %211 = vmatpush.msra.mxu0 0.0
    %212 = vmatpush.msra.mxu0 0.0
    %213 = vmatpush.msra.mxu0 0.0
    %214 = vmatpush.msra.mxu0 0.0
    %215 = vmatpush.msra.mxu0 0.0
    %216 = vmatpush.msra.mxu0 0.0
    %217 = vmatpush.msra.mxu0 0.0
    %218 = vmatpush.msra.mxu0 0.0
    %219 = vmatpush.msra.mxu0 0.0
    %220 = vmatpush.msra.mxu0 0.0
    %221 = vmatpush.msra.mxu0 0.0
    %222 = vmatpush.msra.mxu0 %v155
    %223 = vmatpush.msra.mxu0 %v151
    %224 = vmatpush.msra.mxu0 %v147
    %225 = vmatpush.msra.mxu0 %v143
    %226 = vmatmul.f32.gmra.mxu0 %v168
    %v227 = vpop.f32.mrf.mxu0
    %v228 = vadd.f32 %v161, %v227
    %229 = vdwg.mxu0
    %230 = vmatpush.msra.mxu0 0.0
    %231 = vmatpush.msra.mxu0 0.0
    %232 = vmatpush.msra.mxu0 0.0
    %233 = vmatpush.msra.mxu0 0.0
    %234 = vmatpush.msra.mxu0 0.0
    %235 = vmatpush.msra.mxu0 0.0
    %236 = vmatpush.msra.mxu0 0.0
    %237 = vmatpush.msra.mxu0 0.0
    %238 = vmatpush.msra.mxu0 0.0
    %239 = vmatpush.msra.mxu0 0.0
    %240 = vmatpush.msra.mxu0 0.0
    %241 = vmatpush.msra.mxu0 0.0
    %242 = vmatpush.msra.mxu0 %v156
    %243 = vmatpush.msra.mxu0 %v152
    %244 = vmatpush.msra.mxu0 %v148
    %245 = vmatpush.msra.mxu0 %v144
    %246 = vmatmul.f32.gmra.mxu0 %v168
    %v247 = vpop.f32.mrf.mxu0
    %v248 = vadd.f32 %v162, %v247
    %249 = vdwg.mxu0
    %v250 = vld [vmem:[%s7] sm:$0x1]
    %251 = vmax.xlane.f32.xlu0 %v188
    %v252 = vpop.xlane.xlu0 %251
    %v253 = vsub.f32 %v188, %v252
    %v254 = vmul.f32 %v253, 1.442695
    %v255 = vpow.pop %v254
    %256 = vadd.xlane.f32.xlu0 %v255
    %v257 = vpop.xlane.xlu0 %256
    %v258 = vrcp.pop %v257
    %v259 = vmul.f32 %v257, %v258
    %v260 = vsub.f32 2.0, %v259
    %v261 = vmul.f32 %v258, %v260
    %v262 = vmul.f32 %v255, %v261
    %v263 = vmax.f32 %v262, 0.001
    %v265 = vperm.slane %v250, 0
    %v267 = vmul.f32 %v263, %v265
    %268 = vadd.xlane.f32.xlu0 %v267
    %v269 = vpop.xlane.xlu0 %268
    %vm270 = vcmask 7168
    %271 = vst.msk [vmem:[%s8] sm:$0xff] %vm270, %v269
    %272 = vmax.xlane.f32.xlu0 %v208
    %v273 = vpop.xlane.xlu0 %272
    %v274 = vsub.f32 %v208, %v273
    %v275 = vmul.f32 %v274, 1.442695
    %v276 = vpow.pop %v275
    %277 = vadd.xlane.f32.xlu0 %v276
    %v278 = vpop.xlane.xlu0 %277
    %v279 = vrcp.pop %v278
    %v280 = vmul.f32 %v278, %v279
    %v281 = vsub.f32 2.0, %v280
    %v282 = vmul.f32 %v279, %v281
    %v283 = vmul.f32 %v276, %v282
    %v284 = vmax.f32 %v283, 0.001
    %v285 = vmul.f32 %v284, %v265
    %286 = vadd.xlane.f32.xlu0 %v285
    %v287 = vpop.xlane.xlu0 %286
    %vm288 = vcmask 15368
    %289 = vst.msk [vmem:[%s8] sm:$0xff] %vm288, %v287
    %290 = vmax.xlane.f32.xlu0 %v228
    %v291 = vpop.xlane.xlu0 %290
    %v292 = vsub.f32 %v228, %v291
    %v293 = vmul.f32 %v292, 1.442695
    %v294 = vpow.pop %v293
    %295 = vadd.xlane.f32.xlu0 %v294
    %v296 = vpop.xlane.xlu0 %295
    %v297 = vrcp.pop %v296
    %v298 = vmul.f32 %v296, %v297
    %v299 = vsub.f32 2.0, %v298
    %v300 = vmul.f32 %v297, %v299
    %v301 = vmul.f32 %v294, %v300
    %v302 = vmax.f32 %v301, 0.001
    %v303 = vmul.f32 %v302, %v265
    %304 = vadd.xlane.f32.xlu0 %v303
    %v305 = vpop.xlane.xlu0 %304
    %vm306 = vcmask 23568
    %307 = vst.msk [vmem:[%s8] sm:$0xff] %vm306, %v305
    %308 = vmax.xlane.f32.xlu0 %v248
    %v309 = vpop.xlane.xlu0 %308
    %v310 = vsub.f32 %v248, %v309
    %v311 = vmul.f32 %v310, 1.442695
    %v312 = vpow.pop %v311
    %313 = vadd.xlane.f32.xlu0 %v312
    %v314 = vpop.xlane.xlu0 %313
    %v315 = vrcp.pop %v314
    %v316 = vmul.f32 %v314, %v315
    %v317 = vsub.f32 2.0, %v316
    %v318 = vmul.f32 %v315, %v317
    %v319 = vmul.f32 %v312, %v318
    %v320 = vmax.f32 %v319, 0.001
    %v321 = vmul.f32 %v320, %v265
    %322 = vadd.xlane.f32.xlu0 %v321
    %v323 = vpop.xlane.xlu0 %322
    %vm324 = vcmask 31768
    %325 = vst.msk [vmem:[%s8] sm:$0xff] %vm324, %v323
    // Predicated region
    $region46: #{categorical_dqn_forward.1} parent=1 // pred_check
      _
    $region47: #{categorical_dqn_forward.1} parent=1 // pred_check_branch
      %327 = sbr.rel (0) target = $region49
    $region48: #{categorical_dqn_forward.1} parent=1 // pred_region
      _
    $region49: #{categorical_dqn_forward.1} parent=1 // pred_fallthru
      _
    // Predicated region
    $region50: #{categorical_dqn_forward.1} parent=1 // pred_check
      _
    $region51: #{categorical_dqn_forward.1} parent=1 // pred_check_branch
      %329 = sbr.rel (0) target = $region53
    $region52: #{categorical_dqn_forward.1} parent=1 // pred_region
      _
    $region53: #{categorical_dqn_forward.1} parent=1 // pred_fallthru
      _
    %330 = vsyncpa [#allocation3], 1
    %331 = vsyncpa [#allocation5], 1

</llo_original>
